<compile_context>
chip_gen: v7x
topology: tpu7x:2x2x1
jax: 0.10.0
libtpu: 0.0.40
codegen_flags: <defaults>
</compile_context>

<pallas_src>
import functools

import jax
import jax.numpy as jnp
from jax import lax
from jax.experimental import pallas as pl
from jax.experimental.pallas import tpu as pltpu

TEMP = 0.07
EPS = 1e-12  # matches F.normalize default eps
_INV_TEMP = 1.0 / TEMP


def _contra_loss_kernel(x_ref, y_ref, lp_ref, l_scr, diag_scr, *,
                        tile_b: int, b_valid: int, y_resident: bool,
                        needs_mask: bool):
    """Flash-style contrastive-loss row pass.

    grid = (row tiles ["parallel"], column tiles ["arbitrary"]).
    x_ref: (tB, D) row tile, pre-normalized with 1/temp folded in.
    y_ref: (tB, D) column tile, or the whole (B_pad, D) array if y_resident.
    All logits are bounded above by C = 1/temp (pre-normalized rows), so the
    softmax uses the static shift C instead of an online running max.
    """
    i = pl.program_id(0)
    j = pl.program_id(1)
    nj = pl.num_programs(1)
    c_bound = jnp.float32(_INV_TEMP)

    @pl.when(j == 0)
    def _init():
        l_scr[...] = jnp.zeros_like(l_scr)
        diag_scr[...] = jnp.zeros_like(diag_scr)

    x = x_ref[...]
    if y_resident:
        col0 = pl.multiple_of(j * tile_b, tile_b)
        y = y_ref[pl.ds(col0, tile_b), :]
    else:
        y = y_ref[...]

    # xn @ yn.T on the MXU (contract dim 1 of both operands), f32 accumulation.
    dot = lax.dot_general(x, y, dimension_numbers=(((1,), (1,)), ((), ())),
                          preferred_element_type=jnp.float32)

    # Diagonal logits live in the column tile with j == i.  Take them from the
    # SAME dot tile so numerator and denominator stay consistent in bf16.
    @pl.when(j == i)
    def _diag():
        r = lax.broadcasted_iota(jnp.int32, dot.shape, 0)
        c = lax.broadcasted_iota(jnp.int32, dot.shape, 1)
        diag_scr[...] = jnp.sum(jnp.where(r == c, dot, 0.0), axis=1,
                                keepdims=True)

    # Denominator: accumulate sum(exp(dot - C)) over column tiles (no running max).
    e = jnp.exp(dot - c_bound)
    if needs_mask:  # zero out padded columns (only the last column tile has any)
        col = j * tile_b + lax.broadcasted_iota(jnp.int32, dot.shape, 1)
        e = jnp.where(col < b_valid, e, 0.0)
    l_scr[...] = l_scr[...] + jnp.sum(e, axis=1, keepdims=True)

    @pl.when(j == nj - 1)
    def _finalize():
        lp_ref[...] = diag_scr[...] - c_bound - jnp.log(l_scr[...])


def _choose_tile(B: int) -> int:
    """Lane/MXU-aligned row/col tile (multiple of 128; 256 matches v6e/v7x MXU).

    Keeps >= 2 row tiles whenever B > 128 (dual-TC v7x) and keeps the (tB, tB)
    logits tile small (<= 256 KiB f32) to limit vreg/VMEM pressure.
    """
    if B <= 512:
        return 128
    return 256


def _vmem_capacity_bytes() -> int:
    try:
        return int(pltpu.get_tpu_info().vmem_capacity_bytes)
    except Exception:
        return 64 << 20  # conservative: v7x per-TensorCore VMEM


def contra_loss(x, y, *, use_bf16=True):
    """-mean(log softmax diag) of (normalize(x) @ normalize(y).T) / temp."""
    B, D = x.shape
    assert y.shape == (B, D)
    # TODO(synk): for tiny B*D a plain fused-XLA path beats any kernel launch; kept
    # on the Pallas path here so the kernel itself is exercised.

    # Hoisted normalization: F.normalize(p=2, dim=1) == v * rsqrt(max(||v||^2, eps^2)),
    # with 1/temp folded into x so the BxB logits need no extra scaling in-kernel.
    x32 = x.astype(jnp.float32)
    y32 = y.astype(jnp.float32)
    x_scale = jnp.float32(_INV_TEMP) * lax.rsqrt(
        jnp.maximum(jnp.sum(x32 * x32, axis=1, keepdims=True), EPS * EPS))
    y_scale = lax.rsqrt(
        jnp.maximum(jnp.sum(y32 * y32, axis=1, keepdims=True), EPS * EPS))
    in_dtype = jnp.bfloat16 if use_bf16 else jnp.float32
    xn = (x32 * x_scale).astype(in_dtype)
    yn = (y32 * y_scale).astype(in_dtype)

    # Lane-aligned tiles; ragged B handled by zero padding + in-kernel masking.
    tB = _choose_tile(B)
    b_pad = tB * pl.cdiv(B, tB)
    if b_pad != B:
        xn = jnp.pad(xn, ((0, b_pad - B), (0, 0)))
        yn = jnp.pad(yn, ((0, b_pad - B), (0, 0)))
    grid = (b_pad // tB, b_pad // tB)

    # Keep y resident in VMEM when small enough (cuts y HBM traffic from
    # (B/tB)*B*D to B*D); budget is conservative so it is safe on v7x (64 MiB).
    vmem_cap = _vmem_capacity_bytes()
    itemsize = jnp.dtype(in_dtype).itemsize
    y_resident = (b_pad * D * itemsize) <= (vmem_cap // 8)
    if y_resident:
        y_spec = pl.BlockSpec((b_pad, D), lambda i, j: (0, 0))
    else:
        y_spec = pl.BlockSpec((tB, D), lambda i, j: (j, 0))

    kernel = functools.partial(
        _contra_loss_kernel, tile_b=tB, b_valid=B,
        y_resident=y_resident, needs_mask=(b_pad != B))

    log_prob = pl.pallas_call(
        kernel,
        out_shape=jax.ShapeDtypeStruct((b_pad, 1), jnp.float32),
        grid_spec=pltpu.PrefetchScalarGridSpec(
            num_scalar_prefetch=0,
            grid=grid,
            in_specs=[
                pl.BlockSpec((tB, D), lambda i, j: (i, 0)),  # x row tile
                y_spec,                                      # y column tile / resident
            ],
            out_specs=pl.BlockSpec((tB, 1), lambda i, j: (i, 0)),
            scratch_shapes=[
                pltpu.VMEM((tB, 1), jnp.float32),  # softmax denominator l
                pltpu.VMEM((tB, 1), jnp.float32),  # diagonal logits
            ],
        ),
        compiler_params=pltpu.CompilerParams(
            dimension_semantics=("parallel", "arbitrary"),
            vmem_limit_bytes=int(min(vmem_cap * 3 // 4, 96 << 20)),
        ),
    )(xn, yn)

    # Trivial final reduction (dropping padded rows) is left to XLA.
    return -jnp.mean(log_prob[:B, 0])


def contra_loss_ref(x, y):
    # pure-JAX reference mirroring the PyTorch code
    x = x.astype(jnp.float32)
    y = y.astype(jnp.float32)
    xn = x / jnp.maximum(jnp.linalg.norm(x, axis=1, keepdims=True), EPS)
    yn = y / jnp.maximum(jnp.linalg.norm(y, axis=1, keepdims=True), EPS)
    dot = (xn @ yn.T) / TEMP
    dot = dot - jnp.max(dot, axis=1, keepdims=True)
    log_prob = jnp.diag(dot) - jnp.log(jnp.sum(jnp.exp(dot), axis=1))
    return -jnp.mean(log_prob)


if __name__ == "__main__":
    key = jax.random.PRNGKey(0)
    kx, ky = jax.random.split(key)
    B, D = 8, 32  # small shapes consistent with 2-D projection-head inputs
    x = jax.random.normal(kx, (B, D), dtype=jnp.float32)
    y = jax.random.normal(ky, (B, D), dtype=jnp.float32)

    loss_ref = jax.block_until_ready(contra_loss_ref(x, y))

    # Default (bf16 MXU) path — bf16-appropriate tolerance.
    loss_bf16 = jax.block_until_ready(contra_loss(x, y))
    assert jnp.isfinite(loss_bf16), "bf16-path loss is not finite"
    assert jnp.allclose(loss_bf16, loss_ref, rtol=5e-2, atol=5e-2), (loss_bf16, loss_ref)

    # f32 path — tight check against the reference.
    loss_f32 = jax.block_until_ready(contra_loss(x, y, use_bf16=False))
    assert jnp.isfinite(loss_f32), "f32-path loss is not finite"
    assert jnp.allclose(loss_f32, loss_ref, rtol=1e-4, atol=1e-5), (loss_f32, loss_ref)

    # Multi-tile grid + ragged-B (pad + column mask) path.
    B2, D2 = 300, 64
    x2 = jax.random.normal(jax.random.PRNGKey(1), (B2, D2), dtype=jnp.float32)
    y2 = jax.random.normal(jax.random.PRNGKey(2), (B2, D2), dtype=jnp.float32)
    loss2 = jax.block_until_ready(contra_loss(x2, y2, use_bf16=False))
    loss2_ref = jax.block_until_ready(contra_loss_ref(x2, y2))
    assert jnp.allclose(loss2, loss2_ref, rtol=1e-4, atol=1e-5), (loss2, loss2_ref)

    print("KERNEL_OK")
</pallas_src>

<mosaic_0001>
module attributes {stable_mosaic.version = 11 : i64} {
  func.func @_contra_loss_kernel(%arg0: i32, %arg1: i32, %arg2: memref<128x32xbf16, #tpu.memory_space<vmem>>, %arg3: memref<128x32xbf16, #tpu.memory_space<vmem>>, %arg4: memref<128x1xf32, #tpu.memory_space<vmem>>, %arg5: memref<128x1xf32, #tpu.memory_space<vmem>>, %arg6: memref<128x1xf32, #tpu.memory_space<vmem>>) attributes {dimension_semantics = [#tpu.dimension_semantics<parallel>, #tpu.dimension_semantics<arbitrary>], iteration_bounds = array<i64: 1, 1>, scalar_prefetch = 0 : i64, scratch_operands = 2 : i64, tpu.core_type = #tpu.core_type<tc>, window_params = [{transform_indices = @transform_0, window_bounds = array<i64: 128, 32>}, {pipeline_mode = #tpu.pipeline_mode<synchronous>, transform_indices = @transform_1, window_bounds = array<i64: 128, 32>}, {transform_indices = @transform_2, window_bounds = array<i64: 128, 1>}]} {
    %c0_i32 = arith.constant 0 : i32
    %0 = arith.cmpi eq, %arg1, %c0_i32 : i32
    %1 = arith.extui %0 : i1 to i32
    %c0_i32_0 = arith.constant 0 : i32
    %2 = arith.cmpi ne, %1, %c0_i32_0 : i32
    scf.if %2 {
      %cst_15 = arith.constant 0.000000e+00 : f32
      %31 = vector.broadcast %cst_15 : f32 to vector<128x1xf32>
      %c0_16 = arith.constant 0 : index
      %c0_17 = arith.constant 0 : index
      %32 = vector.load %arg5[%c0_16, %c0_17] : memref<128x1xf32, #tpu.memory_space<vmem>>, vector<128x1xf32>
      tpu.vector_store %arg5[%c0_16, %c0_17], %31 {strides = array<i32>} : memref<128x1xf32, #tpu.memory_space<vmem>>, vector<128x1xf32>,
      %cst_18 = arith.constant 0.000000e+00 : f32
      %33 = vector.broadcast %cst_18 : f32 to vector<128x1xf32>
      %c0_19 = arith.constant 0 : index
      %c0_20 = arith.constant 0 : index
      %34 = vector.load %arg6[%c0_19, %c0_20] : memref<128x1xf32, #tpu.memory_space<vmem>>, vector<128x1xf32>
      tpu.vector_store %arg6[%c0_19, %c0_20], %33 {strides = array<i32>} : memref<128x1xf32, #tpu.memory_space<vmem>>, vector<128x1xf32>,
    } else {
    }
    %c0 = arith.constant 0 : index
    %c0_1 = arith.constant 0 : index
    %3 = vector.load %arg2[%c0, %c0_1] : memref<128x32xbf16, #tpu.memory_space<vmem>>, vector<128x32xbf16>
    %c128_i32 = arith.constant 128 : i32
    %4 = arith.muli %arg1, %c128_i32 : i32
    %5 = tpu.assume_multiple %4, 128 : i32
    %6 = arith.index_cast %5 : i32 to index
    %c0_2 = arith.constant 0 : index
    %7 = vector.load %arg3[%6, %c0_2] : memref<128x32xbf16, #tpu.memory_space<vmem>>, vector<128x32xbf16>
    %cst = arith.constant dense<0.000000e+00> : vector<128x128xf32>
    %8 = tpu.matmul %3, %7, %cst {dimension_numbers = #tpu.dot_dimension_numbers<[1], [1], [0], [0], [0, 0, 1, 0], [], []>} : vector<128x32xbf16>, vector<128x32xbf16>, vector<128x128xf32> -> vector<128x128xf32>
    %9 = arith.cmpi eq, %arg1, %arg0 : i32
    %10 = arith.extui %9 : i1 to i32
    %c0_i32_3 = arith.constant 0 : i32
    %11 = arith.cmpi ne, %10, %c0_i32_3 : i32
    scf.if %11 {
      %31 = tpu.iota {dimensions = array<i32: 0>} : vector<128x128xi32>
      %32 = tpu.iota {dimensions = array<i32: 1>} : vector<128x128xi32>
      %33 = arith.cmpi eq, %31, %32 : vector<128x128xi32>
      %cst_15 = arith.constant 0.000000e+00 : f32
      %34 = vector.broadcast %cst_15 : f32 to vector<128x128xf32>
      %35 = arith.select %33, %8, %34 : vector<128x128xi1>, vector<128x128xf32>
      %cst_16 = arith.constant dense<0.000000e+00> : vector<128xf32>
      %36 = vector.multi_reduction <add>, %35, %cst_16 [1] : vector<128x128xf32> to vector<128xf32>
      %37 = vector.shape_cast %36 : vector<128xf32> to vector<128x1xf32>
      %c0_17 = arith.constant 0 : index
      %c0_18 = arith.constant 0 : index
      %38 = vector.load %arg6[%c0_17, %c0_18] : memref<128x1xf32, #tpu.memory_space<vmem>>, vector<128x1xf32>
      tpu.vector_store %arg6[%c0_17, %c0_18], %37 {strides = array<i32>} : memref<128x1xf32, #tpu.memory_space<vmem>>, vector<128x1xf32>,
    } else {
    }
    %cst_4 = arith.constant 14.2857141 : f32
    %12 = vector.broadcast %cst_4 : f32 to vector<128x128xf32>
    %13 = arith.subf %8, %12 : vector<128x128xf32>
    %14 = math.exp %13 : vector<128x128xf32>
    %c128_i32_5 = arith.constant 128 : i32
    %15 = arith.muli %arg1, %c128_i32_5 : i32
    %16 = tpu.iota {dimensions = array<i32: 1>} : vector<128x128xi32>
    %17 = vector.broadcast %15 : i32 to vector<128x128xi32>
    %18 = arith.addi %17, %16 : vector<128x128xi32>
    %c8_i32 = arith.constant 8 : i32
    %19 = vector.broadcast %c8_i32 : i32 to vector<128x128xi32>
    %20 = arith.cmpi slt, %18, %19 : vector<128x128xi32>
    %cst_6 = arith.constant 0.000000e+00 : f32
    %21 = vector.broadcast %cst_6 : f32 to vector<128x128xf32>
    %22 = arith.select %20, %14, %21 : vector<128x128xi1>, vector<128x128xf32>
    %c0_7 = arith.constant 0 : index
    %c0_8 = arith.constant 0 : index
    %23 = vector.load %arg5[%c0_7, %c0_8] : memref<128x1xf32, #tpu.memory_space<vmem>>, vector<128x1xf32>
    %cst_9 = arith.constant dense<0.000000e+00> : vector<128xf32>
    %24 = vector.multi_reduction <add>, %22, %cst_9 [1] : vector<128x128xf32> to vector<128xf32>
    %25 = vector.shape_cast %24 : vector<128xf32> to vector<128x1xf32>
    %26 = arith.addf %23, %25 : vector<128x1xf32>
    %c0_10 = arith.constant 0 : index
    %c0_11 = arith.constant 0 : index
    %27 = vector.load %arg5[%c0_10, %c0_11] : memref<128x1xf32, #tpu.memory_space<vmem>>, vector<128x1xf32>
    tpu.vector_store %arg5[%c0_10, %c0_11], %26 {strides = array<i32>} : memref<128x1xf32, #tpu.memory_space<vmem>>, vector<128x1xf32>,
    %c0_i32_12 = arith.constant 0 : i32
    %28 = arith.cmpi eq, %arg1, %c0_i32_12 : i32
    %29 = arith.extui %28 : i1 to i32
    %cst_13 = arith.constant 14.2857141 : f32
    %c0_i32_14 = arith.constant 0 : i32
    %30 = arith.cmpi ne, %29, %c0_i32_14 : i32
    scf.if %30 {
      %c0_15 = arith.constant 0 : index
      %c0_16 = arith.constant 0 : index
      %31 = vector.load %arg6[%c0_15, %c0_16] : memref<128x1xf32, #tpu.memory_space<vmem>>, vector<128x1xf32>
      %32 = vector.broadcast %cst_13 : f32 to vector<128x1xf32>
      %33 = arith.subf %31, %32 : vector<128x1xf32>
      %c0_17 = arith.constant 0 : index
      %c0_18 = arith.constant 0 : index
      %34 = vector.load %arg5[%c0_17, %c0_18] : memref<128x1xf32, #tpu.memory_space<vmem>>, vector<128x1xf32>
      %35 = math.log %34 : vector<128x1xf32>
      %36 = arith.subf %33, %35 : vector<128x1xf32>
      %c0_19 = arith.constant 0 : index
      %c0_20 = arith.constant 0 : index
      %37 = vector.load %arg4[%c0_19, %c0_20] : memref<128x1xf32, #tpu.memory_space<vmem>>, vector<128x1xf32>
      tpu.vector_store %arg4[%c0_19, %c0_20], %36 {strides = array<i32>} : memref<128x1xf32, #tpu.memory_space<vmem>>, vector<128x1xf32>,
    } else {
    }
    return
  }
  func.func @transform_0(%arg0: i32, %arg1: i32) -> (i32, i32) {
    %c0_i32 = arith.constant 0 : i32
    %c0_i32_0 = arith.constant 0 : i32
    return %arg0, %c0_i32 : i32, i32
  }
  func.func @transform_1(%arg0: i32, %arg1: i32) -> (i32, i32) {
    %c0_i32 = arith.constant 0 : i32
    %c0_i32_0 = arith.constant 0 : i32
    %c0_i32_1 = arith.constant 0 : i32
    return %c0_i32, %c0_i32_0 : i32, i32
  }
  func.func @transform_2(%arg0: i32, %arg1: i32) -> (i32, i32) {
    %c0_i32 = arith.constant 0 : i32
    %c0_i32_0 = arith.constant 0 : i32
    return %arg0, %c0_i32 : i32, i32
  }
}

</mosaic_0001>

<llo_original>
// kernel: tpu_custom_call.1
$region0: #{tpu_custom_call.1}
  #allocation0 [shape = 'u32[]', space=smem, size = 0x4, offset = 0x4, fixed_abs, tag = 'smem constant byte address 0x4 - core index']
  #allocation1 [shape = 'u32[144,128]{1,0:T(1,128)}', space=vmem, size = 0x12000, scoped, tag = 'internal scratch']
  #allocation2 [shape = 'f32[128,1]{1,0:T(8,128)}', space=vmem, size = 0x10000, scoped, tag = 'scratch operand']
  #allocation3 [shape = 'f32[128,1]{1,0:T(8,128)}', space=vmem, size = 0x10000, scoped, tag = 'scratch operand']
  %s0 = inlined_call_operand.vmem [shape: bf16[128,32], index: 0, kind: input, shape index: {}]
  %s1 = inlined_call_operand.vmem [shape: bf16[128,32], index: 1, kind: input, shape index: {}]
  %s2 = inlined_call_operand.vmem [shape: f32[128,1], index: 2, kind: output, shape index: {}]
  %s3 = sld [smem:[#allocation0]]
  $region30: #{tpu_custom_call.1} parent=0
    _
  %s5 = ssub.s32 1, %s3
  %s6 = scalar_select 0, %s5, %s3
  // Predicated region
  $region2: #{tpu_custom_call.1} parent=0 // pred_check
    _
  $region3: #{tpu_custom_call.1} parent=0 // pred_check_branch
    %8 = sbr.rel (0) target = $region5
  $region4: #{tpu_custom_call.1} parent=0 // pred_region
    _
  $region5: #{tpu_custom_call.1} parent=0 // pred_fallthru
    _
  // Predicated region
  $region6: #{tpu_custom_call.1} parent=0 // pred_check
    _
  $region7: #{tpu_custom_call.1} parent=0 // pred_check_branch
    %10 = sbr.rel (0) target = $region9
  $region8: #{tpu_custom_call.1} parent=0 // pred_region
    _
  $region9: #{tpu_custom_call.1} parent=0 // pred_fallthru
    _
  %p12 = scmp.eq.s32.totalorder 0, 0
  // Predicated region
  $region10: #{tpu_custom_call.1} parent=0 // pred_check
    %p13 = pneg %p12
  $region11: #{tpu_custom_call.1} parent=0 // pred_check_branch
    %15 = sbr.rel (%p13) target = $region13
  $region12: #{tpu_custom_call.1} parent=0 // pred_region
    %vm16 = vcmask 7168
    %17 = vst.msk [vmem:[#allocation2] sm:$0xff] %vm16, 0.0
    %18 = vst.msk [vmem:[#allocation2 + $0x8] sm:$0xff] %vm16, 0.0
    %19 = vst.msk [vmem:[#allocation2 + $0x10] sm:$0xff] %vm16, 0.0
    %20 = vst.msk [vmem:[#allocation2 + $0x18] sm:$0xff] %vm16, 0.0
    %21 = vst.msk [vmem:[#allocation2 + $0x20] sm:$0xff] %vm16, 0.0
    %22 = vst.msk [vmem:[#allocation2 + $0x28] sm:$0xff] %vm16, 0.0
    %23 = vst.msk [vmem:[#allocation2 + $0x30] sm:$0xff] %vm16, 0.0
    %24 = vst.msk [vmem:[#allocation2 + $0x38] sm:$0xff] %vm16, 0.0
    %25 = vst.msk [vmem:[#allocation2 + $0x40] sm:$0xff] %vm16, 0.0
    %26 = vst.msk [vmem:[#allocation2 + $0x48] sm:$0xff] %vm16, 0.0
    %27 = vst.msk [vmem:[#allocation2 + $0x50] sm:$0xff] %vm16, 0.0
    %28 = vst.msk [vmem:[#allocation2 + $0x58] sm:$0xff] %vm16, 0.0
    %29 = vst.msk [vmem:[#allocation2 + $0x60] sm:$0xff] %vm16, 0.0
    %30 = vst.msk [vmem:[#allocation2 + $0x68] sm:$0xff] %vm16, 0.0
    %31 = vst.msk [vmem:[#allocation2 + $0x70] sm:$0xff] %vm16, 0.0
    %32 = vst.msk [vmem:[#allocation2 + $0x78] sm:$0xff] %vm16, 0.0
    %33 = vst.msk [vmem:[#allocation3] sm:$0xff] %vm16, 0.0
    %34 = vst.msk [vmem:[#allocation3 + $0x8] sm:$0xff] %vm16, 0.0
    %35 = vst.msk [vmem:[#allocation3 + $0x10] sm:$0xff] %vm16, 0.0
    %36 = vst.msk [vmem:[#allocation3 + $0x18] sm:$0xff] %vm16, 0.0
    %37 = vst.msk [vmem:[#allocation3 + $0x20] sm:$0xff] %vm16, 0.0
    %38 = vst.msk [vmem:[#allocation3 + $0x28] sm:$0xff] %vm16, 0.0
    %39 = vst.msk [vmem:[#allocation3 + $0x30] sm:$0xff] %vm16, 0.0
    %40 = vst.msk [vmem:[#allocation3 + $0x38] sm:$0xff] %vm16, 0.0
    %41 = vst.msk [vmem:[#allocation3 + $0x40] sm:$0xff] %vm16, 0.0
    %42 = vst.msk [vmem:[#allocation3 + $0x48] sm:$0xff] %vm16, 0.0
    %43 = vst.msk [vmem:[#allocation3 + $0x50] sm:$0xff] %vm16, 0.0
    %44 = vst.msk [vmem:[#allocation3 + $0x58] sm:$0xff] %vm16, 0.0
    %45 = vst.msk [vmem:[#allocation3 + $0x60] sm:$0xff] %vm16, 0.0
    %46 = vst.msk [vmem:[#allocation3 + $0x68] sm:$0xff] %vm16, 0.0
    %47 = vst.msk [vmem:[#allocation3 + $0x70] sm:$0xff] %vm16, 0.0
    %48 = vst.msk [vmem:[#allocation3 + $0x78] sm:$0xff] %vm16, 0.0
  $region13: #{tpu_custom_call.1} parent=0 // pred_fallthru
    _
  %v49 = vld [vmem:[%s0] sm:$0xf]
  %v50 = vld [vmem:[%s0 + $0x4] sm:$0xf]
  %v51 = vld [vmem:[%s0 + $0x8] sm:$0xf]
  %v52 = vld [vmem:[%s0 + $0xc] sm:$0xf]
  %v53 = vld [vmem:[%s0 + $0x10] sm:$0xf]
  %v54 = vld [vmem:[%s0 + $0x14] sm:$0xf]
  %v55 = vld [vmem:[%s0 + $0x18] sm:$0xf]
  %v56 = vld [vmem:[%s0 + $0x1c] sm:$0xf]
  %v57 = vld [vmem:[%s0 + $0x20] sm:$0xf]
  %v58 = vld [vmem:[%s0 + $0x24] sm:$0xf]
  %v59 = vld [vmem:[%s0 + $0x28] sm:$0xf]
  %v60 = vld [vmem:[%s0 + $0x2c] sm:$0xf]
  %v61 = vld [vmem:[%s0 + $0x30] sm:$0xf]
  %v62 = vld [vmem:[%s0 + $0x34] sm:$0xf]
  %v63 = vld [vmem:[%s0 + $0x38] sm:$0xf]
  %v64 = vld [vmem:[%s0 + $0x3c] sm:$0xf]
  %s65 = smul.u32 0, 128
  %s66 = sshra.s32 %s65, 3
  %s67 = sand.u32 %s65, 7
  %s68 = smul.addr %s66, 4
  %s69 = scalar_lea.vmem %s1, %s68
  %v70 = vld [vmem:[%s69] sm:$0xf]
  %v71 = vld [vmem:[%s69 + $0x4] sm:$0xf]
  %v72 = vld [vmem:[%s69 + $0x8] sm:$0xf]
  %v73 = vld [vmem:[%s69 + $0xc] sm:$0xf]
  %v74 = vld [vmem:[%s69 + $0x10] sm:$0xf]
  %v75 = vld [vmem:[%s69 + $0x14] sm:$0xf]
  %v76 = vld [vmem:[%s69 + $0x18] sm:$0xf]
  %v77 = vld [vmem:[%s69 + $0x1c] sm:$0xf]
  %v78 = vld [vmem:[%s69 + $0x20] sm:$0xf]
  %v79 = vld [vmem:[%s69 + $0x24] sm:$0xf]
  %v80 = vld [vmem:[%s69 + $0x28] sm:$0xf]
  %v81 = vld [vmem:[%s69 + $0x2c] sm:$0xf]
  %v82 = vld [vmem:[%s69 + $0x30] sm:$0xf]
  %v83 = vld [vmem:[%s69 + $0x34] sm:$0xf]
  %v84 = vld [vmem:[%s69 + $0x38] sm:$0xf]
  %v85 = vld [vmem:[%s69 + $0x3c] sm:$0xf]
  %v102 = vunpack.c.l.b16 %v49
  %v103 = vunpack.c.l.b16 %v50
  %v104 = vunpack.c.l.b16 %v51
  %v105 = vunpack.c.l.b16 %v52
  %v106 = vunpack.c.l.b16 %v53
  %v107 = vunpack.c.l.b16 %v54
  %v108 = vunpack.c.l.b16 %v55
  %v109 = vunpack.c.l.b16 %v56
  %v110 = vunpack.c.l.b16 %v57
  %v111 = vunpack.c.l.b16 %v58
  %v112 = vunpack.c.l.b16 %v59
  %v113 = vunpack.c.l.b16 %v60
  %v114 = vunpack.c.l.b16 %v61
  %v115 = vunpack.c.l.b16 %v62
  %v116 = vunpack.c.l.b16 %v63
  %v117 = vunpack.c.l.b16 %v64
  %v118 = vpack.c.b16 %v103, %v102
  %v119 = vpack.c.b16 %v105, %v104
  %v120 = vpack.c.b16 %v107, %v106
  %v121 = vpack.c.b16 %v109, %v108
  %v122 = vpack.c.b16 %v111, %v110
  %v123 = vpack.c.b16 %v113, %v112
  %v124 = vpack.c.b16 %v115, %v114
  %v125 = vpack.c.b16 %v117, %v116
  %v142 = vunpack.c.l.b16 %v70
  %v143 = vunpack.c.l.b16 %v71
  %v144 = vunpack.c.l.b16 %v72
  %v145 = vunpack.c.l.b16 %v73
  %v146 = vunpack.c.l.b16 %v74
  %v147 = vunpack.c.l.b16 %v75
  %v148 = vunpack.c.l.b16 %v76
  %v149 = vunpack.c.l.b16 %v77
  %v150 = vunpack.c.l.b16 %v78
  %v151 = vunpack.c.l.b16 %v79
  %v152 = vunpack.c.l.b16 %v80
  %v153 = vunpack.c.l.b16 %v81
  %v154 = vunpack.c.l.b16 %v82
  %v155 = vunpack.c.l.b16 %v83
  %v156 = vunpack.c.l.b16 %v84
  %v157 = vunpack.c.l.b16 %v85
  %v158 = vpack.c.b16 %v143, %v142
  %v159 = vpack.c.b16 %v145, %v144
  %v160 = vpack.c.b16 %v147, %v146
  %v161 = vpack.c.b16 %v149, %v148
  %v162 = vpack.c.b16 %v151, %v150
  %v163 = vpack.c.b16 %v153, %v152
  %v164 = vpack.c.b16 %v155, %v154
  %v165 = vpack.c.b16 %v157, %v156
  %vm166 = vcmask 261120
  %v168 = vsel %vm166, %v118, 0
  %v171 = vsel %vm166, %v119, 0
  %v174 = vsel %vm166, %v120, 0
  %v177 = vsel %vm166, %v121, 0
  %v180 = vsel %vm166, %v122, 0
  %v183 = vsel %vm166, %v123, 0
  %v186 = vsel %vm166, %v124, 0
  %v189 = vsel %vm166, %v125, 0
  %v192 = vsel %vm166, %v158, 0
  %v195 = vsel %vm166, %v159, 0
  %v198 = vsel %vm166, %v160, 0
  %v201 = vsel %vm166, %v161, 0
  %v204 = vsel %vm166, %v162, 0
  %v207 = vsel %vm166, %v163, 0
  %v210 = vsel %vm166, %v164, 0
  %v213 = vsel %vm166, %v165, 0
  %215 = vmatprep.subr.bf16.mxu0 0
  %216 = vmatpush1.bf16.xpose.msra.mxu0 %v192
  %217 = vmatprep.subr.bf16.mxu0 0
  %218 = vmatpush1.bf16.xpose.msra.mxu0 %v195
  %219 = vmatprep.subr.bf16.mxu0 0
  %220 = vmatpush1.bf16.xpose.msra.mxu0 %v198
  %221 = vmatprep.subr.bf16.mxu0 0
  %222 = vmatpush1.bf16.xpose.msra.mxu0 %v201
  %223 = vmatprep.subr.bf16.mxu0 0
  %224 = vmatpush1.bf16.xpose.msra.mxu0 %v204
  %225 = vmatprep.subr.bf16.mxu0 0
  %226 = vmatpush1.bf16.xpose.msra.mxu0 %v207
  %227 = vmatprep.subr.bf16.mxu0 0
  %228 = vmatpush1.bf16.xpose.msra.mxu0 %v210
  %229 = vmatprep.subr.bf16.mxu0 0
  %230 = vmatpush1.bf16.xpose.msra.mxu0 %v213
  %231 = vmatprep.subr.bf16.mxu0 0
  %232 = vmatpush1.bf16.xpose.msra.mxu0 0
  %233 = vmatprep.subr.bf16.mxu0 0
  %234 = vmatpush1.bf16.xpose.msra.mxu0 0
  %235 = vmatprep.subr.bf16.mxu0 0
  %236 = vmatpush1.bf16.xpose.msra.mxu0 0
  %237 = vmatprep.subr.bf16.mxu0 0
  %238 = vmatpush1.bf16.xpose.msra.mxu0 0
  %239 = vmatprep.subr.bf16.mxu0 0
  %240 = vmatpush1.bf16.xpose.msra.mxu0 0
  %241 = vmatprep.subr.bf16.mxu0 0
  %242 = vmatpush1.bf16.xpose.msra.mxu0 0
  %243 = vmatprep.subr.bf16.mxu0 0
  %244 = vmatpush1.bf16.xpose.msra.mxu0 0
  %245 = vmatprep.subr.bf16.mxu0 0
  %246 = vmatpush1.bf16.xpose.msra.mxu0 0
  %247 = vmatprep.mubr.bf16.mxu0 0
  %248 = vmatmul.mubr.bf16.gmra.mrb[0].mxu0 %v168
  %v249 = vpop.f32.mrb[0].mxu0
  %v250 = vadd.f32 0.0, %v249
  %v251 = vpop.f32.mrb[0].mxu0
  %v252 = vpop.f32.mrb[0].mxu0
  %v253 = vadd.f32 0.0, %v252
  %v254 = vpop.f32.mrb[0].mxu0
  %255 = vmatprep.mubr.bf16.mxu0 0
  %256 = vmatmul.mubr.bf16.gmra.mrb[0].mxu0 %v171
  %v257 = vpop.f32.mrb[0].mxu0
  %v258 = vadd.f32 0.0, %v257
  %v259 = vpop.f32.mrb[0].mxu0
  %v260 = vpop.f32.mrb[0].mxu0
  %v261 = vadd.f32 0.0, %v260
  %v262 = vpop.f32.mrb[0].mxu0
  %263 = vmatprep.mubr.bf16.mxu0 0
  %264 = vmatmul.mubr.bf16.gmra.mrb[0].mxu0 %v174
  %v265 = vpop.f32.mrb[0].mxu0
  %v266 = vadd.f32 0.0, %v265
  %v267 = vpop.f32.mrb[0].mxu0
  %v268 = vpop.f32.mrb[0].mxu0
  %v269 = vadd.f32 0.0, %v268
  %v270 = vpop.f32.mrb[0].mxu0
  %271 = vmatprep.mubr.bf16.mxu0 0
  %272 = vmatmul.mubr.bf16.gmra.mrb[0].mxu0 %v177
  %v273 = vpop.f32.mrb[0].mxu0
  %v274 = vadd.f32 0.0, %v273
  %v275 = vpop.f32.mrb[0].mxu0
  %v276 = vpop.f32.mrb[0].mxu0
  %v277 = vadd.f32 0.0, %v276
  %v278 = vpop.f32.mrb[0].mxu0
  %279 = vmatprep.mubr.bf16.mxu0 0
  %280 = vmatmul.mubr.bf16.gmra.mrb[0].mxu0 %v180
  %v281 = vpop.f32.mrb[0].mxu0
  %v282 = vadd.f32 0.0, %v281
  %v283 = vpop.f32.mrb[0].mxu0
  %v284 = vpop.f32.mrb[0].mxu0
  %v285 = vadd.f32 0.0, %v284
  %v286 = vpop.f32.mrb[0].mxu0
  %287 = vmatprep.mubr.bf16.mxu0 0
  %288 = vmatmul.mubr.bf16.gmra.mrb[0].mxu0 %v183
  %v289 = vpop.f32.mrb[0].mxu0
  %v290 = vadd.f32 0.0, %v289
  %v291 = vpop.f32.mrb[0].mxu0
  %v292 = vpop.f32.mrb[0].mxu0
  %v293 = vadd.f32 0.0, %v292
  %v294 = vpop.f32.mrb[0].mxu0
  %295 = vmatprep.mubr.bf16.mxu0 0
  %296 = vmatmul.mubr.bf16.gmra.mrb[0].mxu0 %v186
  %v297 = vpop.f32.mrb[0].mxu0
  %v298 = vadd.f32 0.0, %v297
  %v299 = vpop.f32.mrb[0].mxu0
  %v300 = vpop.f32.mrb[0].mxu0
  %v301 = vadd.f32 0.0, %v300
  %v302 = vpop.f32.mrb[0].mxu0
  %303 = vmatprep.mubr.bf16.mxu0 0
  %304 = vmatmul.mubr.bf16.gmra.mrb[0].mxu0 %v189
  %v305 = vpop.f32.mrb[0].mxu0
  %v306 = vadd.f32 0.0, %v305
  %v307 = vpop.f32.mrb[0].mxu0
  %v308 = vpop.f32.mrb[0].mxu0
  %v309 = vadd.f32 0.0, %v308
  %v310 = vpop.f32.mrb[0].mxu0
  %311 = vdwg.mxu0
  %p312 = scmp.eq.s32.totalorder 0, 0
  // Predicated region
  $region14: #{tpu_custom_call.1} parent=0 // pred_check
    %p313 = pneg %p312
  $region15: #{tpu_custom_call.1} parent=0 // pred_check_branch
    %315 = sbr.rel (%p313) target = $region17
  $region16: #{tpu_custom_call.1} parent=0 // pred_region
    %v316 = vlaneseq
    %v317 = vshrl.u32 %v316, 7
    %v318 = vadd.s32 %v317, 8
    %v319 = vadd.s32 %v317, 16
    %v320 = vadd.s32 %v317, 24
    %v321 = vadd.s32 %v317, 32
    %v322 = vadd.s32 %v317, 40
    %v323 = vadd.s32 %v317, 48
    %v324 = vadd.s32 %v317, 56
    %v325 = vadd.s32 %v317, 64
    %v326 = vadd.s32 %v317, 72
    %v327 = vadd.s32 %v317, 80
    %v328 = vadd.s32 %v317, 88
    %v329 = vadd.s32 %v317, 96
    %v330 = vadd.s32 %v317, 104
    %v331 = vadd.s32 %v317, 112
    %v332 = vadd.s32 %v317, 120
    %v333 = vlaneseq
    %v334 = vand.u32 %v333, 127
    %vm335 = vcmp.eq.s32.totalorder %v317, %v334
    %vm336 = vcmp.eq.s32.totalorder %v318, %v334
    %vm337 = vcmp.eq.s32.totalorder %v319, %v334
    %vm338 = vcmp.eq.s32.totalorder %v320, %v334
    %vm339 = vcmp.eq.s32.totalorder %v321, %v334
    %vm340 = vcmp.eq.s32.totalorder %v322, %v334
    %vm341 = vcmp.eq.s32.totalorder %v323, %v334
    %vm342 = vcmp.eq.s32.totalorder %v324, %v334
    %vm343 = vcmp.eq.s32.totalorder %v325, %v334
    %vm344 = vcmp.eq.s32.totalorder %v326, %v334
    %vm345 = vcmp.eq.s32.totalorder %v327, %v334
    %vm346 = vcmp.eq.s32.totalorder %v328, %v334
    %vm347 = vcmp.eq.s32.totalorder %v329, %v334
    %vm348 = vcmp.eq.s32.totalorder %v330, %v334
    %vm349 = vcmp.eq.s32.totalorder %v331, %v334
    %vm350 = vcmp.eq.s32.totalorder %v332, %v334
    %v351 = vsel %vm335, %v250, 0.0
    %v352 = vsel %vm336, %v253, 0.0
    %v353 = vsel %vm337, %v258, 0.0
    %v354 = vsel %vm338, %v261, 0.0
    %v355 = vsel %vm339, %v266, 0.0
    %v356 = vsel %vm340, %v269, 0.0
    %v357 = vsel %vm341, %v274, 0.0
    %v358 = vsel %vm342, %v277, 0.0
    %v359 = vsel %vm343, %v282, 0.0
    %v360 = vsel %vm344, %v285, 0.0
    %v361 = vsel %vm345, %v290, 0.0
    %v362 = vsel %vm346, %v293, 0.0
    %v363 = vsel %vm347, %v298, 0.0
    %v364 = vsel %vm348, %v301, 0.0
    %v365 = vsel %vm349, %v306, 0.0
    %v366 = vsel %vm350, %v309, 0.0
    %367 = vadd.xlane.f32.xlu0 %v351
    %v368 = vpop.xlane.xlu0 %367
    %369 = vadd.xlane.f32.xlu0 %v352
    %v370 = vpop.xlane.xlu0 %369
    %371 = vadd.xlane.f32.xlu0 %v353
    %v372 = vpop.xlane.xlu0 %371
    %373 = vadd.xlane.f32.xlu0 %v354
    %v374 = vpop.xlane.xlu0 %373
    %375 = vadd.xlane.f32.xlu0 %v355
    %v376 = vpop.xlane.xlu0 %375
    %377 = vadd.xlane.f32.xlu0 %v356
    %v378 = vpop.xlane.xlu0 %377
    %379 = vadd.xlane.f32.xlu0 %v357
    %v380 = vpop.xlane.xlu0 %379
    %381 = vadd.xlane.f32.xlu0 %v358
    %v382 = vpop.xlane.xlu0 %381
    %383 = vadd.xlane.f32.xlu0 %v359
    %v384 = vpop.xlane.xlu0 %383
    %385 = vadd.xlane.f32.xlu0 %v360
    %v386 = vpop.xlane.xlu0 %385
    %387 = vadd.xlane.f32.xlu0 %v361
    %v388 = vpop.xlane.xlu0 %387
    %389 = vadd.xlane.f32.xlu0 %v362
    %v390 = vpop.xlane.xlu0 %389
    %391 = vadd.xlane.f32.xlu0 %v363
    %v392 = vpop.xlane.xlu0 %391
    %393 = vadd.xlane.f32.xlu0 %v364
    %v394 = vpop.xlane.xlu0 %393
    %395 = vadd.xlane.f32.xlu0 %v365
    %v396 = vpop.xlane.xlu0 %395
    %397 = vadd.xlane.f32.xlu0 %v366
    %v398 = vpop.xlane.xlu0 %397
    %vm399 = vcmask 7168
    %400 = vst.msk [vmem:[#allocation3] sm:$0xff] %vm399, %v368
    %401 = vst.msk [vmem:[#allocation3 + $0x8] sm:$0xff] %vm399, %v370
    %402 = vst.msk [vmem:[#allocation3 + $0x10] sm:$0xff] %vm399, %v372
    %403 = vst.msk [vmem:[#allocation3 + $0x18] sm:$0xff] %vm399, %v374
    %404 = vst.msk [vmem:[#allocation3 + $0x20] sm:$0xff] %vm399, %v376
    %405 = vst.msk [vmem:[#allocation3 + $0x28] sm:$0xff] %vm399, %v378
    %406 = vst.msk [vmem:[#allocation3 + $0x30] sm:$0xff] %vm399, %v380
    %407 = vst.msk [vmem:[#allocation3 + $0x38] sm:$0xff] %vm399, %v382
    %408 = vst.msk [vmem:[#allocation3 + $0x40] sm:$0xff] %vm399, %v384
    %409 = vst.msk [vmem:[#allocation3 + $0x48] sm:$0xff] %vm399, %v386
    %410 = vst.msk [vmem:[#allocation3 + $0x50] sm:$0xff] %vm399, %v388
    %411 = vst.msk [vmem:[#allocation3 + $0x58] sm:$0xff] %vm399, %v390
    %412 = vst.msk [vmem:[#allocation3 + $0x60] sm:$0xff] %vm399, %v392
    %413 = vst.msk [vmem:[#allocation3 + $0x68] sm:$0xff] %vm399, %v394
    %414 = vst.msk [vmem:[#allocation3 + $0x70] sm:$0xff] %vm399, %v396
    %415 = vst.msk [vmem:[#allocation3 + $0x78] sm:$0xff] %vm399, %v398
  $region17: #{tpu_custom_call.1} parent=0 // pred_fallthru
    _
  %v416 = vsub.f32 %v250, 14.285714
  %v417 = vsub.f32 %v253, 14.285714
  %v418 = vsub.f32 %v258, 14.285714
  %v419 = vsub.f32 %v261, 14.285714
  %v420 = vsub.f32 %v266, 14.285714
  %v421 = vsub.f32 %v269, 14.285714
  %v422 = vsub.f32 %v274, 14.285714
  %v423 = vsub.f32 %v277, 14.285714
  %v424 = vsub.f32 %v282, 14.285714
  %v425 = vsub.f32 %v285, 14.285714
  %v426 = vsub.f32 %v290, 14.285714
  %v427 = vsub.f32 %v293, 14.285714
  %v428 = vsub.f32 %v298, 14.285714
  %v429 = vsub.f32 %v301, 14.285714
  %v430 = vsub.f32 %v306, 14.285714
  %v431 = vsub.f32 %v309, 14.285714
  %v432 = vmul.f32 %v416, 1.442695
  %v433 = vpow.pop %v432
  %v434 = vmul.f32 %v417, 1.442695
  %v435 = vpow.pop %v434
  %v436 = vmul.f32 %v418, 1.442695
  %v437 = vpow.pop %v436
  %v438 = vmul.f32 %v419, 1.442695
  %v439 = vpow.pop %v438
  %v440 = vmul.f32 %v420, 1.442695
  %v441 = vpow.pop %v440
  %v442 = vmul.f32 %v421, 1.442695
  %v443 = vpow.pop %v442
  %v444 = vmul.f32 %v422, 1.442695
  %v445 = vpow.pop %v444
  %v446 = vmul.f32 %v423, 1.442695
  %v447 = vpow.pop %v446
  %v448 = vmul.f32 %v424, 1.442695
  %v449 = vpow.pop %v448
  %v450 = vmul.f32 %v425, 1.442695
  %v451 = vpow.pop %v450
  %v452 = vmul.f32 %v426, 1.442695
  %v453 = vpow.pop %v452
  %v454 = vmul.f32 %v427, 1.442695
  %v455 = vpow.pop %v454
  %v456 = vmul.f32 %v428, 1.442695
  %v457 = vpow.pop %v456
  %v458 = vmul.f32 %v429, 1.442695
  %v459 = vpow.pop %v458
  %v460 = vmul.f32 %v430, 1.442695
  %v461 = vpow.pop %v460
  %v462 = vmul.f32 %v431, 1.442695
  %v463 = vpow.pop %v462
  %v464 = vlaneseq
  %v465 = vand.u32 %v464, 127
  %v466 = vstv %s65
  %v467 = vadd.s32 %v466, %v465
  %vm468 = vcmp.lt.s32.totalorder %v467, 8
  %v469 = vsel %vm468, %v433, 0.0
  %v470 = vsel %vm468, %v435, 0.0
  %v471 = vsel %vm468, %v437, 0.0
  %v472 = vsel %vm468, %v439, 0.0
  %v473 = vsel %vm468, %v441, 0.0
  %v474 = vsel %vm468, %v443, 0.0
  %v475 = vsel %vm468, %v445, 0.0
  %v476 = vsel %vm468, %v447, 0.0
  %v477 = vsel %vm468, %v449, 0.0
  %v478 = vsel %vm468, %v451, 0.0
  %v479 = vsel %vm468, %v453, 0.0
  %v480 = vsel %vm468, %v455, 0.0
  %v481 = vsel %vm468, %v457, 0.0
  %v482 = vsel %vm468, %v459, 0.0
  %v483 = vsel %vm468, %v461, 0.0
  %v484 = vsel %vm468, %v463, 0.0
  %v485 = vld [vmem:[#allocation2] sm:$0xff]
  %v486 = vld [vmem:[#allocation2 + $0x8] sm:$0xff]
  %v487 = vld [vmem:[#allocation2 + $0x10] sm:$0xff]
  %v488 = vld [vmem:[#allocation2 + $0x18] sm:$0xff]
  %v489 = vld [vmem:[#allocation2 + $0x20] sm:$0xff]
  %v490 = vld [vmem:[#allocation2 + $0x28] sm:$0xff]
  %v491 = vld [vmem:[#allocation2 + $0x30] sm:$0xff]
  %v492 = vld [vmem:[#allocation2 + $0x38] sm:$0xff]
  %v493 = vld [vmem:[#allocation2 + $0x40] sm:$0xff]
  %v494 = vld [vmem:[#allocation2 + $0x48] sm:$0xff]
  %v495 = vld [vmem:[#allocation2 + $0x50] sm:$0xff]
  %v496 = vld [vmem:[#allocation2 + $0x58] sm:$0xff]
  %v497 = vld [vmem:[#allocation2 + $0x60] sm:$0xff]
  %v498 = vld [vmem:[#allocation2 + $0x68] sm:$0xff]
  %v499 = vld [vmem:[#allocation2 + $0x70] sm:$0xff]
  %v500 = vld [vmem:[#allocation2 + $0x78] sm:$0xff]
  %501 = vadd.xlane.f32.xlu0 %v469
  %v502 = vpop.xlane.xlu0 %501
  %503 = vadd.xlane.f32.xlu0 %v470
  %v504 = vpop.xlane.xlu0 %503
  %505 = vadd.xlane.f32.xlu0 %v471
  %v506 = vpop.xlane.xlu0 %505
  %507 = vadd.xlane.f32.xlu0 %v472
  %v508 = vpop.xlane.xlu0 %507
  %509 = vadd.xlane.f32.xlu0 %v473
  %v510 = vpop.xlane.xlu0 %509
  %511 = vadd.xlane.f32.xlu0 %v474
  %v512 = vpop.xlane.xlu0 %511
  %513 = vadd.xlane.f32.xlu0 %v475
  %v514 = vpop.xlane.xlu0 %513
  %515 = vadd.xlane.f32.xlu0 %v476
  %v516 = vpop.xlane.xlu0 %515
  %517 = vadd.xlane.f32.xlu0 %v477
  %v518 = vpop.xlane.xlu0 %517
  %519 = vadd.xlane.f32.xlu0 %v478
  %v520 = vpop.xlane.xlu0 %519
  %521 = vadd.xlane.f32.xlu0 %v479
  %v522 = vpop.xlane.xlu0 %521
  %523 = vadd.xlane.f32.xlu0 %v480
  %v524 = vpop.xlane.xlu0 %523
  %525 = vadd.xlane.f32.xlu0 %v481
  %v526 = vpop.xlane.xlu0 %525
  %527 = vadd.xlane.f32.xlu0 %v482
  %v528 = vpop.xlane.xlu0 %527
  %529 = vadd.xlane.f32.xlu0 %v483
  %v530 = vpop.xlane.xlu0 %529
  %531 = vadd.xlane.f32.xlu0 %v484
  %v532 = vpop.xlane.xlu0 %531
  %v533 = vadd.f32 %v485, %v502
  %v534 = vadd.f32 %v486, %v504
  %v535 = vadd.f32 %v487, %v506
  %v536 = vadd.f32 %v488, %v508
  %v537 = vadd.f32 %v489, %v510
  %v538 = vadd.f32 %v490, %v512
  %v539 = vadd.f32 %v491, %v514
  %v540 = vadd.f32 %v492, %v516
  %v541 = vadd.f32 %v493, %v518
  %v542 = vadd.f32 %v494, %v520
  %v543 = vadd.f32 %v495, %v522
  %v544 = vadd.f32 %v496, %v524
  %v545 = vadd.f32 %v497, %v526
  %v546 = vadd.f32 %v498, %v528
  %v547 = vadd.f32 %v499, %v530
  %v548 = vadd.f32 %v500, %v532
  %vm549 = vcmask 7168
  %550 = vst.msk [vmem:[#allocation2] sm:$0xff] %vm549, %v533
  %551 = vst.msk [vmem:[#allocation2 + $0x8] sm:$0xff] %vm549, %v534
  %552 = vst.msk [vmem:[#allocation2 + $0x10] sm:$0xff] %vm549, %v535
  %553 = vst.msk [vmem:[#allocation2 + $0x18] sm:$0xff] %vm549, %v536
  %554 = vst.msk [vmem:[#allocation2 + $0x20] sm:$0xff] %vm549, %v537
  %555 = vst.msk [vmem:[#allocation2 + $0x28] sm:$0xff] %vm549, %v538
  %556 = vst.msk [vmem:[#allocation2 + $0x30] sm:$0xff] %vm549, %v539
  %557 = vst.msk [vmem:[#allocation2 + $0x38] sm:$0xff] %vm549, %v540
  %558 = vst.msk [vmem:[#allocation2 + $0x40] sm:$0xff] %vm549, %v541
  %559 = vst.msk [vmem:[#allocation2 + $0x48] sm:$0xff] %vm549, %v542
  %560 = vst.msk [vmem:[#allocation2 + $0x50] sm:$0xff] %vm549, %v543
  %561 = vst.msk [vmem:[#allocation2 + $0x58] sm:$0xff] %vm549, %v544
  %562 = vst.msk [vmem:[#allocation2 + $0x60] sm:$0xff] %vm549, %v545
  %563 = vst.msk [vmem:[#allocation2 + $0x68] sm:$0xff] %vm549, %v546
  %564 = vst.msk [vmem:[#allocation2 + $0x70] sm:$0xff] %vm549, %v547
  %565 = vst.msk [vmem:[#allocation2 + $0x78] sm:$0xff] %vm549, %v548
  // Predicated region
  $region18: #{tpu_custom_call.1} parent=0 // pred_check
    %p566 = pneg %p12
  $region19: #{tpu_custom_call.1} parent=0 // pred_check_branch
    %568 = sbr.rel (%p566) target = $region21
  $region20: #{tpu_custom_call.1} parent=0 // pred_region
    %v569 = vld [vmem:[#allocation3] sm:$0xff]
    %v570 = vld [vmem:[#allocation3 + $0x8] sm:$0xff]
    %v571 = vld [vmem:[#allocation3 + $0x10] sm:$0xff]
    %v572 = vld [vmem:[#allocation3 + $0x18] sm:$0xff]
    %v573 = vld [vmem:[#allocation3 + $0x20] sm:$0xff]
    %v574 = vld [vmem:[#allocation3 + $0x28] sm:$0xff]
    %v575 = vld [vmem:[#allocation3 + $0x30] sm:$0xff]
    %v576 = vld [vmem:[#allocation3 + $0x38] sm:$0xff]
    %v577 = vld [vmem:[#allocation3 + $0x40] sm:$0xff]
    %v578 = vld [vmem:[#allocation3 + $0x48] sm:$0xff]
    %v579 = vld [vmem:[#allocation3 + $0x50] sm:$0xff]
    %v580 = vld [vmem:[#allocation3 + $0x58] sm:$0xff]
    %v581 = vld [vmem:[#allocation3 + $0x60] sm:$0xff]
    %v582 = vld [vmem:[#allocation3 + $0x68] sm:$0xff]
    %v583 = vld [vmem:[#allocation3 + $0x70] sm:$0xff]
    %v584 = vld [vmem:[#allocation3 + $0x78] sm:$0xff]
    %v585 = vsub.f32 %v569, 14.285714
    %v586 = vsub.f32 %v570, 14.285714
    %v587 = vsub.f32 %v571, 14.285714
    %v588 = vsub.f32 %v572, 14.285714
    %v589 = vsub.f32 %v573, 14.285714
    %v590 = vsub.f32 %v574, 14.285714
    %v591 = vsub.f32 %v575, 14.285714
    %v592 = vsub.f32 %v576, 14.285714
    %v593 = vsub.f32 %v577, 14.285714
    %v594 = vsub.f32 %v578, 14.285714
    %v595 = vsub.f32 %v579, 14.285714
    %v596 = vsub.f32 %v580, 14.285714
    %v597 = vsub.f32 %v581, 14.285714
    %v598 = vsub.f32 %v582, 14.285714
    %v599 = vsub.f32 %v583, 14.285714
    %v600 = vsub.f32 %v584, 14.285714
    %v601 = vld [vmem:[#allocation2] sm:$0xff]
    %v602 = vld [vmem:[#allocation2 + $0x8] sm:$0xff]
    %v603 = vld [vmem:[#allocation2 + $0x10] sm:$0xff]
    %v604 = vld [vmem:[#allocation2 + $0x18] sm:$0xff]
    %v605 = vld [vmem:[#allocation2 + $0x20] sm:$0xff]
    %v606 = vld [vmem:[#allocation2 + $0x28] sm:$0xff]
    %v607 = vld [vmem:[#allocation2 + $0x30] sm:$0xff]
    %v608 = vld [vmem:[#allocation2 + $0x38] sm:$0xff]
    %v609 = vld [vmem:[#allocation2 + $0x40] sm:$0xff]
    %v610 = vld [vmem:[#allocation2 + $0x48] sm:$0xff]
    %v611 = vld [vmem:[#allocation2 + $0x50] sm:$0xff]
    %v612 = vld [vmem:[#allocation2 + $0x58] sm:$0xff]
    %v613 = vld [vmem:[#allocation2 + $0x60] sm:$0xff]
    %v614 = vld [vmem:[#allocation2 + $0x68] sm:$0xff]
    %v615 = vld [vmem:[#allocation2 + $0x70] sm:$0xff]
    %v616 = vld [vmem:[#allocation2 + $0x78] sm:$0xff]
    %v617 = vlog2.pop %v601
    %v618 = vmul.f32 %v617, 0.6931472
    %v619 = vlog2.pop %v602
    %v620 = vmul.f32 %v619, 0.6931472
    %v621 = vlog2.pop %v603
    %v622 = vmul.f32 %v621, 0.6931472
    %v623 = vlog2.pop %v604
    %v624 = vmul.f32 %v623, 0.6931472
    %v625 = vlog2.pop %v605
    %v626 = vmul.f32 %v625, 0.6931472
    %v627 = vlog2.pop %v606
    %v628 = vmul.f32 %v627, 0.6931472
    %v629 = vlog2.pop %v607
    %v630 = vmul.f32 %v629, 0.6931472
    %v631 = vlog2.pop %v608
    %v632 = vmul.f32 %v631, 0.6931472
    %v633 = vlog2.pop %v609
    %v634 = vmul.f32 %v633, 0.6931472
    %v635 = vlog2.pop %v610
    %v636 = vmul.f32 %v635, 0.6931472
    %v637 = vlog2.pop %v611
    %v638 = vmul.f32 %v637, 0.6931472
    %v639 = vlog2.pop %v612
    %v640 = vmul.f32 %v639, 0.6931472
    %v641 = vlog2.pop %v613
    %v642 = vmul.f32 %v641, 0.6931472
    %v643 = vlog2.pop %v614
    %v644 = vmul.f32 %v643, 0.6931472
    %v645 = vlog2.pop %v615
    %v646 = vmul.f32 %v645, 0.6931472
    %v647 = vlog2.pop %v616
    %v648 = vmul.f32 %v647, 0.6931472
    %v649 = vsub.f32 %v585, %v618
    %v650 = vsub.f32 %v586, %v620
    %v651 = vsub.f32 %v587, %v622
    %v652 = vsub.f32 %v588, %v624
    %v653 = vsub.f32 %v589, %v626
    %v654 = vsub.f32 %v590, %v628
    %v655 = vsub.f32 %v591, %v630
    %v656 = vsub.f32 %v592, %v632
    %v657 = vsub.f32 %v593, %v634
    %v658 = vsub.f32 %v594, %v636
    %v659 = vsub.f32 %v595, %v638
    %v660 = vsub.f32 %v596, %v640
    %v661 = vsub.f32 %v597, %v642
    %v662 = vsub.f32 %v598, %v644
    %v663 = vsub.f32 %v599, %v646
    %v664 = vsub.f32 %v600, %v648
    %665 = vst.msk [vmem:[%s2] sm:$0xff] %vm549, %v649
    %666 = vst.msk [vmem:[%s2 + $0x8] sm:$0xff] %vm549, %v650
    %667 = vst.msk [vmem:[%s2 + $0x10] sm:$0xff] %vm549, %v651
    %668 = vst.msk [vmem:[%s2 + $0x18] sm:$0xff] %vm549, %v652
    %669 = vst.msk [vmem:[%s2 + $0x20] sm:$0xff] %vm549, %v653
    %670 = vst.msk [vmem:[%s2 + $0x28] sm:$0xff] %vm549, %v654
    %671 = vst.msk [vmem:[%s2 + $0x30] sm:$0xff] %vm549, %v655
    %672 = vst.msk [vmem:[%s2 + $0x38] sm:$0xff] %vm549, %v656
    %673 = vst.msk [vmem:[%s2 + $0x40] sm:$0xff] %vm549, %v657
    %674 = vst.msk [vmem:[%s2 + $0x48] sm:$0xff] %vm549, %v658
    %675 = vst.msk [vmem:[%s2 + $0x50] sm:$0xff] %vm549, %v659
    %676 = vst.msk [vmem:[%s2 + $0x58] sm:$0xff] %vm549, %v660
    %677 = vst.msk [vmem:[%s2 + $0x60] sm:$0xff] %vm549, %v661
    %678 = vst.msk [vmem:[%s2 + $0x68] sm:$0xff] %vm549, %v662
    %679 = vst.msk [vmem:[%s2 + $0x70] sm:$0xff] %vm549, %v663
    %680 = vst.msk [vmem:[%s2 + $0x78] sm:$0xff] %vm549, %v664
  $region21: #{tpu_custom_call.1} parent=0 // pred_fallthru
    _
  // Predicated region
  $region22: #{tpu_custom_call.1} parent=0 // pred_check
    _
  $region23: #{tpu_custom_call.1} parent=0 // pred_check_branch
    %682 = sbr.rel (0) target = $region25
  $region24: #{tpu_custom_call.1} parent=0 // pred_region
    _
  $region25: #{tpu_custom_call.1} parent=0 // pred_fallthru
    _
  // Predicated region
  $region26: #{tpu_custom_call.1} parent=0 // pred_check
    _
  $region27: #{tpu_custom_call.1} parent=0 // pred_check_branch
    %684 = sbr.rel (0) target = $region29
  $region28: #{tpu_custom_call.1} parent=0 // pred_region
    _
  $region29: #{tpu_custom_call.1} parent=0 // pred_fallthru
    _

</llo_original>
